<compile_context>
chip_gen: v6e
topology: v6e:2x2x1
jax: 0.10.0
libtpu: 0.0.40
codegen_flags: <defaults>
</compile_context>

<pallas_src>
import math

import jax
import jax.numpy as jnp
from jax.experimental import pallas as pl
from jax.experimental.pallas import tpu as pltpu


def _sub_for_dtype(dtype):
    """Sublane rows per sample slab = native packing of the dtype."""
    itemsize = jnp.dtype(dtype).itemsize
    return {4: 8, 2: 16, 1: 32}.get(itemsize, 8)


# ----------------------------- Pallas kernels ------------------------------ #
def _fwd_diff_tiled_kernel(t_ref, sa_ref, sb_ref, x_ref, noise_ref, out_ref):
    # t_ref:  (B,)  int32   SMEM (scalar prefetch)
    # sa_ref: (T,)  float32 SMEM (sqrt_alphas_cumprod)
    # sb_ref: (T,)  float32 SMEM (sqrt_one_minus_alphas_cumprod)
    # x_ref / noise_ref / out_ref: (1, SUB, TILE_C) VMEM tiles of sample b.
    # grid = (num_col_tiles, B): axis 0 = column tile, axis 1 = batch.
    b = t_ref[pl.program_id(1)] * 0 + t_ref[pl.program_id(1)]  # keep SMEM read scalar
    ti = t_ref[pl.program_id(1)]
    a = sa_ref[ti]  # scalar gather from SMEM
    s = sb_ref[ti]
    out_ref[...] = (a * x_ref[...] + s * noise_ref[...]).astype(out_ref.dtype)


def _fwd_diff_small_kernel(a_ref, s_ref, x_ref, noise_ref, out_ref):
    # a_ref / s_ref: (B, 1, 1) float32 VMEM (per-sample scales, pre-gathered)
    # x_ref / noise_ref / out_ref: (B, SUB, cols) VMEM — whole batch, one step
    out_ref[...] = (a_ref[...] * x_ref[...]
                    + s_ref[...] * noise_ref[...]).astype(out_ref.dtype)


# ------------------------------- wrapper ----------------------------------- #
def forward_diffusion_pallas(x, noise, t, sqrt_alphas_cumprod,
                             sqrt_one_minus_alphas_cumprod, *,
                             max_block_bytes=4 << 20,     # ~4 MiB per ref block
                             small_block_bytes=1 << 20):
    """x, noise: (B, ...) ; t: (B,) int32 -> x_t, same shape/dtype as x."""
    assert x.shape == noise.shape and x.dtype == noise.dtype
    B = x.shape[0]
    N = math.prod(x.shape[1:])
    itemsize = jnp.dtype(x.dtype).itemsize
    SUB = _sub_for_dtype(x.dtype)

    # View each sample as a lane-dense (SUB, cols) slab.  Pad the flattened
    # sample up to a multiple of SUB; the lane axis itself is handled by a
    # cdiv grid with a masked ragged last tile, so cols need not be a
    # multiple of 128.
    n_pad = -(-N // SUB) * SUB
    xf = x.reshape(B, N)
    nf = noise.reshape(B, N)
    if n_pad != N:
        pad = ((0, 0), (0, n_pad - N))
        xf = jnp.pad(xf, pad)
        nf = jnp.pad(nf, pad)
    cols = n_pad // SUB
    x2 = xf.reshape(B, SUB, cols)
    n2 = nf.reshape(B, SUB, cols)

    t = t.astype(jnp.int32)
    sa = sqrt_alphas_cumprod.astype(jnp.float32)
    sb = sqrt_one_minus_alphas_cumprod.astype(jnp.float32)

    # ---- tiny-problem fast path: one grid step for the whole batch ---- #
    if B * n_pad * itemsize <= small_block_bytes:
        a = sa[t].reshape(B, 1, 1)       # tiny XLA gathers in the wrapper
        s = sb[t].reshape(B, 1, 1)
        full = pl.BlockSpec((B, SUB, cols), lambda i: (0, 0, 0))
        scl = pl.BlockSpec((B, 1, 1), lambda i: (0, 0, 0))
        out = pl.pallas_call(
            _fwd_diff_small_kernel,
            out_shape=jax.ShapeDtypeStruct((B, SUB, cols), x.dtype),
            grid=(1,),
            in_specs=[scl, scl, full, full],
            out_specs=full,
            compiler_params=pltpu.CompilerParams(
                dimension_semantics=("arbitrary",)),
        )(a, s, x2, n2)
    else:
        # ---- tiled path: 2-D parallel grid over (column tiles, batch) ---- #
        # Largest lane-dense tile (multiple of 128) under max_block_bytes;
        # 3 refs x 2 buffers x 4 MiB = 24 MiB, under scoped VMEM on v5e/v6e/v7x.
        max_tile_c = max(128, (max_block_bytes // (SUB * itemsize)) // 128 * 128)
        if cols <= max_tile_c:
            tile_c, num_ct = cols, 1
        else:
            tile_c, num_ct = max_tile_c, pl.cdiv(cols, max_tile_c)

        # Column-tile axis leads so the big axis is the one split across
        # TensorCores on v7x; batch is the minor parallel axis.
        blk = pl.BlockSpec((1, SUB, tile_c),
                           lambda c, b, *prefetch: (b, 0, c))
        out = pl.pallas_call(
            _fwd_diff_tiled_kernel,
            out_shape=jax.ShapeDtypeStruct((B, SUB, cols), x.dtype),
            grid_spec=pltpu.PrefetchScalarGridSpec(
                num_scalar_prefetch=3,       # t, sqrt_ac, sqrt_1mac -> SMEM
                grid=(num_ct, B),
                in_specs=[blk, blk],
                out_specs=blk,
            ),
            compiler_params=pltpu.CompilerParams(
                dimension_semantics=("parallel", "parallel"),
                vmem_limit_bytes=32 << 20),
        )(t, sa, sb, x2, n2)

    out = out.reshape(B, n_pad)
    if n_pad != N:
        out = out[:, :N]
    return out.reshape(x.shape)


# ----------------------------- schedule (glue) ----------------------------- #
def cosine_variance_schedule(timesteps, epsilon=0.008):
    steps = jnp.linspace(0.0, float(timesteps), timesteps + 1, dtype=jnp.float32)
    f_t = jnp.cos((steps / timesteps + epsilon) / (1.0 + epsilon) * math.pi * 0.5) ** 2
    betas = jnp.clip(1.0 - f_t[1:] / f_t[:timesteps], 0.0, 0.999)
    return betas


def diffusion_forward(x, noise, t, timesteps, **kwargs):
    """Equivalent of Diffusion._forward_diffusion inside Diffusion.forward."""
    betas = cosine_variance_schedule(timesteps)
    alphas = 1.0 - betas
    alphas_cumprod = jnp.cumprod(alphas, axis=-1)
    sqrt_ac = jnp.sqrt(alphas_cumprod)
    sqrt_1mac = jnp.sqrt(1.0 - alphas_cumprod)
    x_t = forward_diffusion_pallas(x, noise, t, sqrt_ac, sqrt_1mac, **kwargs)
    return x_t, (sqrt_ac, sqrt_1mac)


def _ref_forward_diffusion(x, noise, t, timesteps):
    """Pure-JAX reference of Diffusion._forward_diffusion."""
    betas = cosine_variance_schedule(timesteps)
    alphas_cumprod = jnp.cumprod(1.0 - betas, axis=-1)
    sqrt_ac = jnp.sqrt(alphas_cumprod)
    sqrt_1mac = jnp.sqrt(1.0 - alphas_cumprod)
    buf = (x.shape[0],) + (1,) * (x.ndim - 1)
    xf = x.astype(jnp.float32)
    nf = noise.astype(jnp.float32)
    out = sqrt_ac[t].reshape(buf) * xf + sqrt_1mac[t].reshape(buf) * nf
    return out.astype(x.dtype)


# --------------------------------- main ------------------------------------ #
if __name__ == "__main__":
    timesteps = 100
    # small shapes consistent with the module: (B, in_channels=1, seq, H, W)
    B, C, S, H, W = 2, 1, 8, 16, 16

    key = jax.random.PRNGKey(0)
    kx, kn, kt = jax.random.split(key, 3)
    x = jax.random.normal(kx, (B, C, S, H, W), dtype=jnp.float32)
    noise = jax.random.normal(kn, (B, C, S, H, W), dtype=jnp.float32)
    # t = torch.randint(0, timesteps, (B,)) -> deterministic JAX equivalent
    t = jax.random.randint(kt, (B,), 0, timesteps, dtype=jnp.int32)
    ref = _ref_forward_diffusion(x, noise, t, timesteps)

    # 1) default path (tiny-problem single-step kernel at this shape)
    x_t, _ = diffusion_forward(x, noise, t, timesteps)
    x_t = jax.block_until_ready(x_t)
    assert x_t.shape == x.shape and x_t.dtype == x.dtype
    assert jnp.allclose(x_t, ref, atol=1e-6, rtol=1e-6)

    # 2) force the tiled (col-tile x batch) pipelined path
    x_t2, _ = diffusion_forward(x, noise, t, timesteps, small_block_bytes=0)
    x_t2 = jax.block_until_ready(x_t2)
    assert jnp.allclose(x_t2, ref, atol=1e-6, rtol=1e-6)

    # 3) ragged lane axis: cdiv grid with a masked last column tile
    x3 = jax.random.normal(kx, (B, C, 10, H, W), dtype=jnp.float32)
    n3 = jax.random.normal(kn, (B, C, 10, H, W), dtype=jnp.float32)
    ref3 = _ref_forward_diffusion(x3, n3, t, timesteps)
    x_t3, _ = diffusion_forward(x3, n3, t, timesteps,
                                small_block_bytes=0, max_block_bytes=4096)
    x_t3 = jax.block_until_ready(x_t3)
    assert jnp.allclose(x_t3, ref3, atol=1e-6, rtol=1e-6)

    # 4) bf16 I/O variant (dtype-dependent SUB=16 sublane packing)
    xb = x.astype(jnp.bfloat16)
    nb = noise.astype(jnp.bfloat16)
    refb = _ref_forward_diffusion(xb, nb, t, timesteps)
    x_tb, _ = diffusion_forward(xb, nb, t, timesteps, small_block_bytes=0)
    x_tb = jax.block_until_ready(x_tb)
    assert x_tb.dtype == jnp.bfloat16
    assert jnp.allclose(x_tb.astype(jnp.float32), refb.astype(jnp.float32),
                        atol=2e-2, rtol=2e-2)

    print("KERNEL_OK")
</pallas_src>

<mosaic_0001>
module attributes {stable_mosaic.version = 11 : i64} {
  func.func @_fwd_diff_small_kernel(%arg0: i32, %arg1: memref<2x1x1xf32, #tpu.memory_space<vmem>>, %arg2: memref<2x1x1xf32, #tpu.memory_space<vmem>>, %arg3: memref<2x8x256xf32, #tpu.memory_space<vmem>>, %arg4: memref<2x8x256xf32, #tpu.memory_space<vmem>>, %arg5: memref<2x8x256xf32, #tpu.memory_space<vmem>>) attributes {dimension_semantics = [#tpu.dimension_semantics<arbitrary>], iteration_bounds = array<i64: 1>, scalar_prefetch = 0 : i64, scratch_operands = 0 : i64, tpu.core_type = #tpu.core_type<tc>, window_params = [{pipeline_mode = #tpu.pipeline_mode<synchronous>, transform_indices = @transform_0, window_bounds = array<i64: 2, 1, 1>}, {pipeline_mode = #tpu.pipeline_mode<synchronous>, transform_indices = @transform_1, window_bounds = array<i64: 2, 1, 1>}, {pipeline_mode = #tpu.pipeline_mode<synchronous>, transform_indices = @transform_2, window_bounds = array<i64: 2, 8, 256>}, {pipeline_mode = #tpu.pipeline_mode<synchronous>, transform_indices = @transform_3, window_bounds = array<i64: 2, 8, 256>}, {pipeline_mode = #tpu.pipeline_mode<synchronous>, transform_indices = @transform_4, window_bounds = array<i64: 2, 8, 256>}]} {
    %c0 = arith.constant 0 : index
    %c0_0 = arith.constant 0 : index
    %c0_1 = arith.constant 0 : index
    %0 = vector.load %arg1[%c0, %c0_0, %c0_1] : memref<2x1x1xf32, #tpu.memory_space<vmem>>, vector<2x1x1xf32>
    %c0_2 = arith.constant 0 : index
    %c0_3 = arith.constant 0 : index
    %c0_4 = arith.constant 0 : index
    %1 = vector.load %arg3[%c0_2, %c0_3, %c0_4] : memref<2x8x256xf32, #tpu.memory_space<vmem>>, vector<2x8x256xf32>
    %2 = vector.broadcast %0 : vector<2x1x1xf32> to vector<2x8x256xf32>
    %3 = arith.mulf %2, %1 : vector<2x8x256xf32>
    %c0_5 = arith.constant 0 : index
    %c0_6 = arith.constant 0 : index
    %c0_7 = arith.constant 0 : index
    %4 = vector.load %arg2[%c0_5, %c0_6, %c0_7] : memref<2x1x1xf32, #tpu.memory_space<vmem>>, vector<2x1x1xf32>
    %c0_8 = arith.constant 0 : index
    %c0_9 = arith.constant 0 : index
    %c0_10 = arith.constant 0 : index
    %5 = vector.load %arg4[%c0_8, %c0_9, %c0_10] : memref<2x8x256xf32, #tpu.memory_space<vmem>>, vector<2x8x256xf32>
    %6 = vector.broadcast %4 : vector<2x1x1xf32> to vector<2x8x256xf32>
    %7 = arith.mulf %6, %5 : vector<2x8x256xf32>
    %8 = arith.addf %3, %7 : vector<2x8x256xf32>
    %c0_11 = arith.constant 0 : index
    %c0_12 = arith.constant 0 : index
    %c0_13 = arith.constant 0 : index
    %9 = vector.load %arg5[%c0_11, %c0_12, %c0_13] : memref<2x8x256xf32, #tpu.memory_space<vmem>>, vector<2x8x256xf32>
    tpu.vector_store %arg5[%c0_11, %c0_12, %c0_13], %8 {strides = array<i32>} : memref<2x8x256xf32, #tpu.memory_space<vmem>>, vector<2x8x256xf32>,
    return
  }
  func.func @transform_0(%arg0: i32) -> (i32, i32, i32) {
    %c0_i32 = arith.constant 0 : i32
    %c0_i32_0 = arith.constant 0 : i32
    %c0_i32_1 = arith.constant 0 : i32
    %c0_i32_2 = arith.constant 0 : i32
    return %c0_i32, %c0_i32_0, %c0_i32_1 : i32, i32, i32
  }
  func.func @transform_1(%arg0: i32) -> (i32, i32, i32) {
    %c0_i32 = arith.constant 0 : i32
    %c0_i32_0 = arith.constant 0 : i32
    %c0_i32_1 = arith.constant 0 : i32
    %c0_i32_2 = arith.constant 0 : i32
    return %c0_i32, %c0_i32_0, %c0_i32_1 : i32, i32, i32
  }
  func.func @transform_2(%arg0: i32) -> (i32, i32, i32) {
    %c0_i32 = arith.constant 0 : i32
    %c0_i32_0 = arith.constant 0 : i32
    %c0_i32_1 = arith.constant 0 : i32
    %c0_i32_2 = arith.constant 0 : i32
    return %c0_i32, %c0_i32_0, %c0_i32_1 : i32, i32, i32
  }
  func.func @transform_3(%arg0: i32) -> (i32, i32, i32) {
    %c0_i32 = arith.constant 0 : i32
    %c0_i32_0 = arith.constant 0 : i32
    %c0_i32_1 = arith.constant 0 : i32
    %c0_i32_2 = arith.constant 0 : i32
    return %c0_i32, %c0_i32_0, %c0_i32_1 : i32, i32, i32
  }
  func.func @transform_4(%arg0: i32) -> (i32, i32, i32) {
    %c0_i32 = arith.constant 0 : i32
    %c0_i32_0 = arith.constant 0 : i32
    %c0_i32_1 = arith.constant 0 : i32
    %c0_i32_2 = arith.constant 0 : i32
    return %c0_i32, %c0_i32_0, %c0_i32_1 : i32, i32, i32
  }
}

</mosaic_0001>

<llo_original>
// kernel: tpu_custom_call.1
$region0: #{tpu_custom_call.1}
  #allocation0 [shape = 'u32[]', space=smem, size = 0x4, offset = 0x4, fixed_abs, tag = 'smem constant byte address 0x4 - core index']
  #allocation1 [shape = 'u32[144,128]{1,0:T(1,128)}', space=vmem, size = 0x12000, scoped, tag = 'internal scratch']
  %s0 = inlined_call_operand.vmem [shape: f32[2,1,1], index: 0, kind: input, shape index: {}]
  %s1 = inlined_call_operand.vmem [shape: f32[2,1,1], index: 1, kind: input, shape index: {}]
  %s2 = inlined_call_operand.hbm [shape: f32[2,8,256], index: 2, kind: input, shape index: {}]
  %s3 = inlined_call_operand.hbm [shape: f32[2,8,256], index: 3, kind: input, shape index: {}]
  %s4 = inlined_call_operand.hbm [shape: f32[2,8,256], index: 4, kind: output, shape index: {}]
  %s5 = sld [smem:[#allocation0]]
  $region34: #{tpu_custom_call.1} parent=0
    _
  %s7 = ssub.s32 1, %s5
  %s8 = scalar_select 0, %s7, %s5
  $region1: #{tpu_custom_call.1} parent=0
    #allocation2 [shape = 'u8[16384]{0}', space=vmem, size = 0x4000, scoped, tag = 'input window, operand 2, single buffered']
    #allocation3 [shape = 's32[1]{0}', space=sflag, size = 0x4, scoped, tag = 'scoped memory for tpu_custom_call.1']
    #allocation4 [shape = 's32[1]{0}', space=sflag, size = 0x4, scoped, tag = 'scoped memory for tpu_custom_call.1']
    #allocation5 [shape = 'u8[16384]{0}', space=vmem, size = 0x4000, scoped, tag = 'input window, operand 3, single buffered']
    #allocation6 [shape = 's32[1]{0}', space=sflag, size = 0x4, scoped, tag = 'scoped memory for tpu_custom_call.1']
    #allocation7 [shape = 'u8[16384]{0}', space=vmem, size = 0x4000, scoped, tag = 'output window, operand 0, single buffered']
    %9 = vsyncpa [#allocation3], 0
    %10 = vsyncpa [#allocation6], 0
    %11 = vsyncpa [#allocation4], 0
    // Predicated region
    $region2: #{tpu_custom_call.1} parent=1 // pred_check
      _
    $region3: #{tpu_custom_call.1} parent=1 // pred_check_branch
      %13 = sbr.rel (0) target = $region5
    $region4: #{tpu_custom_call.1} parent=1 // pred_region
      _
    $region5: #{tpu_custom_call.1} parent=1 // pred_fallthru
      _
    // Predicated region
    $region6: #{tpu_custom_call.1} parent=1 // pred_check
      _
    $region7: #{tpu_custom_call.1} parent=1 // pred_check_branch
      %15 = sbr.rel (0) target = $region9
    $region8: #{tpu_custom_call.1} parent=1 // pred_region
      _
    $region9: #{tpu_custom_call.1} parent=1 // pred_fallthru
      _
    // Predicated region
    $region10: #{tpu_custom_call.1} parent=1 // pred_check
      _
    $region11: #{tpu_custom_call.1} parent=1 // pred_check_branch
      %17 = sbr.rel (0) target = $region13
    $region12: #{tpu_custom_call.1} parent=1 // pred_region
      %s19 = ssub.s32 512, 512
      %20 = vsyncadd [#allocation3], %s19
      %s21 = sshll.u32 [#allocation2], 4
      %s22 = int_to_ptr.vmem [resolvable:$true] %s21
      %27 = dma.hbm_to_vmem [thread:$0]  %s2, 512, %s22, [#allocation3], 256, 256, 16
    $region13: #{tpu_custom_call.1} parent=1 // pred_fallthru
      _
    // Predicated region
    $region14: #{tpu_custom_call.1} parent=1 // pred_check
      _
    $region15: #{tpu_custom_call.1} parent=1 // pred_check_branch
      %29 = sbr.rel (0) target = $region17
    $region16: #{tpu_custom_call.1} parent=1 // pred_region
      %s31 = ssub.s32 512, 512
      %32 = vsyncadd [#allocation6], %s31
      %s33 = sshll.u32 [#allocation5], 4
      %s34 = int_to_ptr.vmem [resolvable:$true] %s33
      %39 = dma.hbm_to_vmem [thread:$0]  %s3, 512, %s34, [#allocation6], 256, 256, 16
    $region17: #{tpu_custom_call.1} parent=1 // pred_fallthru
      _
    // Predicated region
    $region18: #{tpu_custom_call.1} parent=1 // pred_check
      _
    $region19: #{tpu_custom_call.1} parent=1 // pred_check_branch
      %41 = sbr.rel (0) target = $region21
    $region20: #{tpu_custom_call.1} parent=1 // pred_region
      %42 = dma.done [#allocation3], 512
    $region21: #{tpu_custom_call.1} parent=1 // pred_fallthru
      _
    // Predicated region
    $region22: #{tpu_custom_call.1} parent=1 // pred_check
      _
    $region23: #{tpu_custom_call.1} parent=1 // pred_check_branch
      %44 = sbr.rel (0) target = $region25
    $region24: #{tpu_custom_call.1} parent=1 // pred_region
      %45 = dma.done [#allocation6], 512
    $region25: #{tpu_custom_call.1} parent=1 // pred_fallthru
      _
    %v46 = vld [vmem:[%s0] sm:$0x1]
    %v47 = vld [vmem:[%s0 + $0x1] sm:$0x1]
    %v48 = vld [vmem:[#allocation2] sm:$0xff]
    %v49 = vld [vmem:[#allocation2 + $0x8] sm:$0xff]
    %v50 = vld [vmem:[#allocation2 + $0x10] sm:$0xff]
    %v51 = vld [vmem:[#allocation2 + $0x18] sm:$0xff]
    %v54 = vlaneseq
    %v55 = vshrl.u32 %v54, 7
    %v56 = vsub.s32 0, %v55
    %v57 = vrot.slane %v46, %v56
    %v58 = vlaneseq
    %v59 = vshrl.u32 %v58, 7
    %v60 = vsub.s32 0, %v59
    %v61 = vrot.slane %v47, %v60
    %62 = vset.pattern.permute.xlu0 0
    %63 = vperm.xlu0 %62, %v57
    %v64 = vpop.permute.xlu0 %63
    %66 = vset.pattern.permute.xlu0 0
    %67 = vperm.xlu0 %66, %v61
    %v68 = vpop.permute.xlu0 %67
    %v70 = vmul.f32 %v64, %v48
    %v71 = vmul.f32 %v64, %v49
    %v72 = vmul.f32 %v68, %v50
    %v73 = vmul.f32 %v68, %v51
    %v74 = vld [vmem:[%s1] sm:$0x1]
    %v75 = vld [vmem:[%s1 + $0x1] sm:$0x1]
    %v76 = vld [vmem:[#allocation5] sm:$0xff]
    %v77 = vld [vmem:[#allocation5 + $0x8] sm:$0xff]
    %v78 = vld [vmem:[#allocation5 + $0x10] sm:$0xff]
    %v79 = vld [vmem:[#allocation5 + $0x18] sm:$0xff]
    %v82 = vlaneseq
    %v83 = vshrl.u32 %v82, 7
    %v84 = vsub.s32 0, %v83
    %v85 = vrot.slane %v74, %v84
    %v86 = vlaneseq
    %v87 = vshrl.u32 %v86, 7
    %v88 = vsub.s32 0, %v87
    %v89 = vrot.slane %v75, %v88
    %90 = vset.pattern.permute.xlu0 0
    %91 = vperm.xlu0 %90, %v85
    %v92 = vpop.permute.xlu0 %91
    %94 = vset.pattern.permute.xlu0 0
    %95 = vperm.xlu0 %94, %v89
    %v96 = vpop.permute.xlu0 %95
    %v98 = vmul.f32 %v92, %v76
    %v99 = vmul.f32 %v92, %v77
    %v100 = vmul.f32 %v96, %v78
    %v101 = vmul.f32 %v96, %v79
    %v102 = vadd.f32 %v70, %v98
    %v103 = vadd.f32 %v71, %v99
    %v104 = vadd.f32 %v72, %v100
    %v105 = vadd.f32 %v73, %v101
    %106 = vst [vmem:[#allocation7] sm:$0xff] %v102
    %107 = vst [vmem:[#allocation7 + $0x8] sm:$0xff] %v103
    %108 = vst [vmem:[#allocation7 + $0x10] sm:$0xff] %v104
    %109 = vst [vmem:[#allocation7 + $0x18] sm:$0xff] %v105
    // Predicated region
    $region26: #{tpu_custom_call.1} parent=1 // pred_check
      _
    $region27: #{tpu_custom_call.1} parent=1 // pred_check_branch
      %111 = sbr.rel (0) target = $region29
    $region28: #{tpu_custom_call.1} parent=1 // pred_region
      %s113 = ssub.s32 512, 512
      %114 = vsyncadd [#allocation4], %s113
      %s115 = sshll.u32 [#allocation7], 4
      %s116 = int_to_ptr.vmem [resolvable:$true] %s115
      %121 = dma.vmem_to_hbm [thread:$0]  %s116, 512, %s4, [#allocation4], 256, 256, 16
    $region29: #{tpu_custom_call.1} parent=1 // pred_fallthru
      _
    // Predicated region
    $region30: #{tpu_custom_call.1} parent=1 // pred_check
      _
    $region31: #{tpu_custom_call.1} parent=1 // pred_check_branch
      %123 = sbr.rel (0) target = $region33
    $region32: #{tpu_custom_call.1} parent=1 // pred_region
      %124 = dma.done [#allocation4], 512
    $region33: #{tpu_custom_call.1} parent=1 // pred_fallthru
      _
    %125 = vsyncpa [#allocation3], 1
    %126 = vsyncpa [#allocation6], 1
    %127 = vsyncpa [#allocation4], 1

</llo_original>
